<compile_context>
chip_gen: v6e
topology: v6e:2x2x1
jax: 0.10.0
libtpu: 0.0.40
codegen_flags: <defaults>
</compile_context>

<pallas_src>
import math

import jax
import jax.numpy as jnp
from jax.experimental import pallas as pl
from jax.experimental.pallas import tpu as pltpu


def _value_net_kernel(xT_ref, w1T_ref, b1_ref, w2_ref, b2_ref, o_ref):
    # fc1 on the MXU: (Hp, S) @ (S, TB) -> (Hp, TB), accumulate in f32.
    h = jnp.dot(w1T_ref[...], xT_ref[...], preferred_element_type=jnp.float32)
    # Bias + ReLU on the VPU in f32 (v5e has no bf16 VALU).
    h = jnp.maximum(h + b1_ref[...], 0.0)                      # (Hp, TB)
    # fc2 (output width 1): VPU multiply + sublane (XLU) reduce instead of an
    # N=1 MXU pass.  w2 is an (Hp, 1) column broadcast across lanes.
    o = jnp.sum(h * w2_ref[...], axis=0, keepdims=True)        # (1, TB)
    # b2 is a scalar living in SMEM.
    o_ref[...] = (o + b2_ref[0]).astype(o_ref.dtype)


def value_net_forward(x, w1, b1, w2, b2, *, block_b=4096,
                      compute_dtype=jnp.float32):
    """ValueNet forward.

    x : (B, n_states) f32
    w1: (n_states, n_hiddens), b1: (n_hiddens,) or (1, n_hiddens)
    w2: (n_hiddens, 1) or (n_hiddens,), b2: scalar / (1,)
    returns (B, 1) f32 — identical semantics to the PyTorch module.
    """
    B, S = x.shape
    H = w1.shape[1]

    # --- lane-dense hidden dim: pad H up to a multiple of 128 -------------
    Hp = max(128, ((H + 127) // 128) * 128)
    w1p = jnp.pad(w1.astype(jnp.float32), ((0, 0), (0, Hp - H)))
    b1p = jnp.pad(jnp.asarray(b1, jnp.float32).reshape(-1),
                  (0, Hp - H)).reshape(Hp, 1)
    w2p = jnp.pad(jnp.asarray(w2, jnp.float32).reshape(-1),
                  (0, Hp - H)).reshape(Hp, 1)
    b2s = jnp.asarray(b2, jnp.float32).reshape((1,))            # SMEM scalar

    # --- batch tile (lanes) ------------------------------------------------
    if B <= block_b:
        TB = B                                  # single tile, full-dim block
    else:
        TB = max(128, (block_b // 128) * 128)   # keep the tile lane-aligned
    Bp = pl.cdiv(B, TB) * TB

    # --- transpose to batch-on-lanes layout (wrapper-side layout plumbing) -
    xT = x.T.astype(compute_dtype)                              # (S, B)
    if Bp != B:
        xT = jnp.pad(xT, ((0, 0), (0, Bp - B)))
    w1T = w1p.T.astype(compute_dtype)                           # (Hp, S)

    grid = (Bp // TB,)
    out = pl.pallas_call(
        _value_net_kernel,
        out_shape=jax.ShapeDtypeStruct((1, Bp), jnp.float32),
        grid=grid,
        in_specs=[
            pl.BlockSpec((S, TB), lambda i: (0, i)),            # x tile
            pl.BlockSpec((Hp, S), lambda i: (0, 0)),            # w1 (resident)
            pl.BlockSpec((Hp, 1), lambda i: (0, 0)),            # b1 (resident)
            pl.BlockSpec((Hp, 1), lambda i: (0, 0)),            # w2 (resident)
            pl.BlockSpec(memory_space=pltpu.MemorySpace.SMEM),  # b2 scalar
        ],
        out_specs=pl.BlockSpec((1, TB), lambda i: (0, i)),      # lane-dense out
        compiler_params=pltpu.CompilerParams(
            dimension_semantics=("parallel",)),
    )(xT, w1T, b1p, w2p, b2s)

    return out[0, :B].reshape(B, 1)


def init_value_net_params(key, n_states, n_hiddens):
    """Deterministic init mirroring torch nn.Linear defaults:
    U(-1/sqrt(fan_in), 1/sqrt(fan_in)) for weights and biases.
    Stored in math layout: w1 (S, H), b1 (H,), w2 (H, 1), b2 (1,)."""
    k1, k2, k3, k4 = jax.random.split(key, 4)
    bound1 = 1.0 / math.sqrt(n_states)
    bound2 = 1.0 / math.sqrt(n_hiddens)
    w1 = jax.random.uniform(k1, (n_states, n_hiddens), jnp.float32, -bound1, bound1)
    b1 = jax.random.uniform(k2, (n_hiddens,), jnp.float32, -bound1, bound1)
    w2 = jax.random.uniform(k3, (n_hiddens, 1), jnp.float32, -bound2, bound2)
    b2 = jax.random.uniform(k4, (1,), jnp.float32, -bound2, bound2)
    return w1, b1, w2, b2


if __name__ == "__main__":
    n_states, n_hiddens, batch = 8, 32, 8

    key = jax.random.PRNGKey(0)
    pkey, xkey = jax.random.split(key)
    w1, b1, w2, b2 = init_value_net_params(pkey, n_states, n_hiddens)
    x = jax.random.normal(xkey, (batch, n_states), jnp.float32)

    out = jax.block_until_ready(value_net_forward(x, w1, b1, w2, b2))
    ref = jnp.maximum(x @ w1 + b1, 0.0) @ w2 + b2
    assert out.shape == (batch, 1)
    assert jnp.allclose(out, ref, atol=1e-5, rtol=1e-5)

    # Exercise the gridded / padded path (multi-step batch grid, ragged B).
    x2 = jax.random.normal(jax.random.PRNGKey(1), (300, n_states), jnp.float32)
    out2 = jax.block_until_ready(
        value_net_forward(x2, w1, b1, w2, b2, block_b=128))
    ref2 = jnp.maximum(x2 @ w1 + b1, 0.0) @ w2 + b2
    assert out2.shape == (300, 1)
    assert jnp.allclose(out2, ref2, atol=1e-5, rtol=1e-5)

    print("KERNEL_OK")
</pallas_src>

<mosaic_0001>
module attributes {stable_mosaic.version = 11 : i64} {
  func.func @_value_net_kernel(%arg0: i32, %arg1: memref<8x8xf32, #tpu.memory_space<vmem>>, %arg2: memref<128x8xf32, #tpu.memory_space<vmem>>, %arg3: memref<128x1xf32, #tpu.memory_space<vmem>>, %arg4: memref<128x1xf32, #tpu.memory_space<vmem>>, %arg5: memref<1xf32, #tpu.memory_space<smem>>, %arg6: memref<1x8xf32, #tpu.memory_space<vmem>>) attributes {dimension_semantics = [#tpu.dimension_semantics<parallel>], iteration_bounds = array<i64: 1>, scalar_prefetch = 0 : i64, scratch_operands = 0 : i64, tpu.core_type = #tpu.core_type<tc>, window_params = [{transform_indices = @transform_0, window_bounds = array<i64: 8, 8>}, {pipeline_mode = #tpu.pipeline_mode<synchronous>, transform_indices = @transform_1, window_bounds = array<i64: 128, 8>}, {pipeline_mode = #tpu.pipeline_mode<synchronous>, transform_indices = @transform_2, window_bounds = array<i64: 128, 1>}, {pipeline_mode = #tpu.pipeline_mode<synchronous>, transform_indices = @transform_3, window_bounds = array<i64: 128, 1>}, {transform_indices = @transform_4, window_bounds = array<i64: 1>}, {transform_indices = @transform_5, window_bounds = array<i64: 1, 8>}]} {
    %c0 = arith.constant 0 : index
    %c0_0 = arith.constant 0 : index
    %0 = vector.load %arg2[%c0, %c0_0] : memref<128x8xf32, #tpu.memory_space<vmem>>, vector<128x8xf32>
    %c0_1 = arith.constant 0 : index
    %c0_2 = arith.constant 0 : index
    %1 = vector.load %arg1[%c0_1, %c0_2] : memref<8x8xf32, #tpu.memory_space<vmem>>, vector<8x8xf32>
    %cst = arith.constant dense<0.000000e+00> : vector<128x8xf32>
    %2 = tpu.matmul %0, %1, %cst {dimension_numbers = #tpu.dot_dimension_numbers<[1], [0], [0], [1], [0, 0, 1, 1], [], []>} : vector<128x8xf32>, vector<8x8xf32>, vector<128x8xf32> -> vector<128x8xf32>
    %c0_3 = arith.constant 0 : index
    %c0_4 = arith.constant 0 : index
    %3 = vector.load %arg3[%c0_3, %c0_4] : memref<128x1xf32, #tpu.memory_space<vmem>>, vector<128x1xf32>
    %4 = vector.broadcast %3 : vector<128x1xf32> to vector<128x8xf32>
    %5 = arith.addf %2, %4 : vector<128x8xf32>
    %cst_5 = arith.constant 0.000000e+00 : f32
    %6 = vector.broadcast %cst_5 : f32 to vector<128x8xf32>
    %7 = arith.maximumf %5, %6 : vector<128x8xf32>
    %c0_6 = arith.constant 0 : index
    %c0_7 = arith.constant 0 : index
    %8 = vector.load %arg4[%c0_6, %c0_7] : memref<128x1xf32, #tpu.memory_space<vmem>>, vector<128x1xf32>
    %9 = vector.broadcast %8 : vector<128x1xf32> to vector<128x8xf32>
    %10 = arith.mulf %7, %9 : vector<128x8xf32>
    %cst_8 = arith.constant dense<0.000000e+00> : vector<8xf32>
    %11 = vector.multi_reduction <add>, %10, %cst_8 [0] : vector<128x8xf32> to vector<8xf32>
    %12 = vector.shape_cast %11 : vector<8xf32> to vector<1x8xf32>
    %c0_9 = arith.constant 0 : index
    %13 = memref.load %arg5[%c0_9] : memref<1xf32, #tpu.memory_space<smem>>
    %14 = vector.broadcast %13 : f32 to vector<1x8xf32>
    %15 = arith.addf %12, %14 : vector<1x8xf32>
    %c0_10 = arith.constant 0 : index
    %c0_11 = arith.constant 0 : index
    %16 = vector.load %arg6[%c0_10, %c0_11] : memref<1x8xf32, #tpu.memory_space<vmem>>, vector<1x8xf32>
    tpu.vector_store %arg6[%c0_10, %c0_11], %15 {strides = array<i32>} : memref<1x8xf32, #tpu.memory_space<vmem>>, vector<1x8xf32>,
    return
  }
  func.func @transform_0(%arg0: i32) -> (i32, i32) {
    %c0_i32 = arith.constant 0 : i32
    %c0_i32_0 = arith.constant 0 : i32
    return %c0_i32, %arg0 : i32, i32
  }
  func.func @transform_1(%arg0: i32) -> (i32, i32) {
    %c0_i32 = arith.constant 0 : i32
    %c0_i32_0 = arith.constant 0 : i32
    %c0_i32_1 = arith.constant 0 : i32
    return %c0_i32, %c0_i32_0 : i32, i32
  }
  func.func @transform_2(%arg0: i32) -> (i32, i32) {
    %c0_i32 = arith.constant 0 : i32
    %c0_i32_0 = arith.constant 0 : i32
    %c0_i32_1 = arith.constant 0 : i32
    return %c0_i32, %c0_i32_0 : i32, i32
  }
  func.func @transform_3(%arg0: i32) -> (i32, i32) {
    %c0_i32 = arith.constant 0 : i32
    %c0_i32_0 = arith.constant 0 : i32
    %c0_i32_1 = arith.constant 0 : i32
    return %c0_i32, %c0_i32_0 : i32, i32
  }
  func.func @transform_4(%arg0: i32) -> i32 {
    %c0_i32 = arith.constant 0 : i32
    %c0_i32_0 = arith.constant 0 : i32
    return %c0_i32 : i32
  }
  func.func @transform_5(%arg0: i32) -> (i32, i32) {
    %c0_i32 = arith.constant 0 : i32
    %c0_i32_0 = arith.constant 0 : i32
    return %c0_i32, %arg0 : i32, i32
  }
}

</mosaic_0001>

<llo_original>
// kernel: tpu_custom_call.1
$region0: #{tpu_custom_call.1}
  #allocation0 [shape = 'u32[]', space=smem, size = 0x4, offset = 0x4, fixed_abs, tag = 'smem constant byte address 0x4 - core index']
  #allocation1 [shape = 'u32[144,128]{1,0:T(1,128)}', space=vmem, size = 0x12000, scoped, tag = 'internal scratch']
  #allocation2 [shape = 'f32[1]{0:T(128)S(6)}', space=smem, size = 0x200, scoped, tag = 'scoped memory for tpu_custom_call.1']
  %s0 = inlined_call_operand.vmem [shape: f32[8,8], index: 0, kind: input, shape index: {}]
  %s1 = inlined_call_operand.vmem [shape: f32[128,8], index: 1, kind: input, shape index: {}]
  %s2 = inlined_call_operand.vmem [shape: f32[128,1], index: 2, kind: input, shape index: {}]
  %s3 = inlined_call_operand.vmem [shape: f32[128,1], index: 3, kind: input, shape index: {}]
  %s4 = inlined_call_operand.<no memory space> [shape: f32[1], index: 4, kind: input, shape index: {}]
  %s5 = inlined_call_operand.hbm [shape: f32[1,8], index: 5, kind: output, shape index: {}]
  %s6 = sld [smem:[#allocation0]]
  $region30: #{tpu_custom_call.1} parent=0
    _
  %s8 = ssub.s32 1, %s6
  %s9 = scalar_select 0, %s8, %s6
  %10 = sst [smem:[#allocation2]] %s4
  $region1: #{tpu_custom_call.1} parent=0
    #allocation3 [shape = 'u8[512]{0}', space=vmem, size = 0x400, scoped, tag = 'output window, operand 0, single buffered']
    #allocation4 [shape = 's32[1]{0}', space=sflag, size = 0x4, scoped, tag = 'scoped memory for tpu_custom_call.1']
    %11 = vsyncpa [#allocation4], 0
    // Predicated region
    $region2: #{tpu_custom_call.1} parent=1 // pred_check
      _
    $region3: #{tpu_custom_call.1} parent=1 // pred_check_branch
      %13 = sbr.rel (0) target = $region5
    $region4: #{tpu_custom_call.1} parent=1 // pred_region
      _
    $region5: #{tpu_custom_call.1} parent=1 // pred_fallthru
      _
    // Predicated region
    $region6: #{tpu_custom_call.1} parent=1 // pred_check
      _
    $region7: #{tpu_custom_call.1} parent=1 // pred_check_branch
      %15 = sbr.rel (0) target = $region9
    $region8: #{tpu_custom_call.1} parent=1 // pred_region
      _
    $region9: #{tpu_custom_call.1} parent=1 // pred_fallthru
      _
    // Predicated region
    $region10: #{tpu_custom_call.1} parent=1 // pred_check
      _
    $region11: #{tpu_custom_call.1} parent=1 // pred_check_branch
      %17 = sbr.rel (0) target = $region13
    $region12: #{tpu_custom_call.1} parent=1 // pred_region
      _
    $region13: #{tpu_custom_call.1} parent=1 // pred_fallthru
      _
    // Predicated region
    $region14: #{tpu_custom_call.1} parent=1 // pred_check
      _
    $region15: #{tpu_custom_call.1} parent=1 // pred_check_branch
      %19 = sbr.rel (0) target = $region17
    $region16: #{tpu_custom_call.1} parent=1 // pred_region
      _
    $region17: #{tpu_custom_call.1} parent=1 // pred_fallthru
      _
    // Predicated region
    $region18: #{tpu_custom_call.1} parent=1 // pred_check
      _
    $region19: #{tpu_custom_call.1} parent=1 // pred_check_branch
      %21 = sbr.rel (0) target = $region21
    $region20: #{tpu_custom_call.1} parent=1 // pred_region
      _
    $region21: #{tpu_custom_call.1} parent=1 // pred_fallthru
      _
    %v22 = vld [vmem:[%s1] sm:$0xff]
    %v23 = vld [vmem:[%s1 + $0x8] sm:$0xff]
    %v24 = vld [vmem:[%s1 + $0x10] sm:$0xff]
    %v25 = vld [vmem:[%s1 + $0x18] sm:$0xff]
    %v26 = vld [vmem:[%s1 + $0x20] sm:$0xff]
    %v27 = vld [vmem:[%s1 + $0x28] sm:$0xff]
    %v28 = vld [vmem:[%s1 + $0x30] sm:$0xff]
    %v29 = vld [vmem:[%s1 + $0x38] sm:$0xff]
    %v30 = vld [vmem:[%s1 + $0x40] sm:$0xff]
    %v31 = vld [vmem:[%s1 + $0x48] sm:$0xff]
    %v32 = vld [vmem:[%s1 + $0x50] sm:$0xff]
    %v33 = vld [vmem:[%s1 + $0x58] sm:$0xff]
    %v34 = vld [vmem:[%s1 + $0x60] sm:$0xff]
    %v35 = vld [vmem:[%s1 + $0x68] sm:$0xff]
    %v36 = vld [vmem:[%s1 + $0x70] sm:$0xff]
    %v37 = vld [vmem:[%s1 + $0x78] sm:$0xff]
    %v38 = vld [vmem:[%s0] sm:$0xff]
    %v39 = vld [vmem:[%s2] sm:$0xff]
    %v40 = vld [vmem:[%s2 + $0x8] sm:$0xff]
    %v41 = vld [vmem:[%s2 + $0x10] sm:$0xff]
    %v42 = vld [vmem:[%s2 + $0x18] sm:$0xff]
    %v43 = vld [vmem:[%s2 + $0x20] sm:$0xff]
    %v44 = vld [vmem:[%s2 + $0x28] sm:$0xff]
    %v45 = vld [vmem:[%s2 + $0x30] sm:$0xff]
    %v46 = vld [vmem:[%s2 + $0x38] sm:$0xff]
    %v47 = vld [vmem:[%s2 + $0x40] sm:$0xff]
    %v48 = vld [vmem:[%s2 + $0x48] sm:$0xff]
    %v49 = vld [vmem:[%s2 + $0x50] sm:$0xff]
    %v50 = vld [vmem:[%s2 + $0x58] sm:$0xff]
    %v51 = vld [vmem:[%s2 + $0x60] sm:$0xff]
    %v52 = vld [vmem:[%s2 + $0x68] sm:$0xff]
    %v53 = vld [vmem:[%s2 + $0x70] sm:$0xff]
    %v54 = vld [vmem:[%s2 + $0x78] sm:$0xff]
    %56 = vset.pattern.permute.xlu0 0
    %57 = vperm.xlu0 %56, %v39
    %v58 = vpop.permute.xlu0 %57
    %61 = vset.pattern.permute.xlu0 0
    %62 = vperm.xlu0 %61, %v40
    %v63 = vpop.permute.xlu0 %62
    %66 = vset.pattern.permute.xlu0 0
    %67 = vperm.xlu0 %66, %v41
    %v68 = vpop.permute.xlu0 %67
    %71 = vset.pattern.permute.xlu0 0
    %72 = vperm.xlu0 %71, %v42
    %v73 = vpop.permute.xlu0 %72
    %76 = vset.pattern.permute.xlu0 0
    %77 = vperm.xlu0 %76, %v43
    %v78 = vpop.permute.xlu0 %77
    %81 = vset.pattern.permute.xlu0 0
    %82 = vperm.xlu0 %81, %v44
    %v83 = vpop.permute.xlu0 %82
    %86 = vset.pattern.permute.xlu0 0
    %87 = vperm.xlu0 %86, %v45
    %v88 = vpop.permute.xlu0 %87
    %91 = vset.pattern.permute.xlu0 0
    %92 = vperm.xlu0 %91, %v46
    %v93 = vpop.permute.xlu0 %92
    %96 = vset.pattern.permute.xlu0 0
    %97 = vperm.xlu0 %96, %v47
    %v98 = vpop.permute.xlu0 %97
    %101 = vset.pattern.permute.xlu0 0
    %102 = vperm.xlu0 %101, %v48
    %v103 = vpop.permute.xlu0 %102
    %106 = vset.pattern.permute.xlu0 0
    %107 = vperm.xlu0 %106, %v49
    %v108 = vpop.permute.xlu0 %107
    %111 = vset.pattern.permute.xlu0 0
    %112 = vperm.xlu0 %111, %v50
    %v113 = vpop.permute.xlu0 %112
    %116 = vset.pattern.permute.xlu0 0
    %117 = vperm.xlu0 %116, %v51
    %v118 = vpop.permute.xlu0 %117
    %121 = vset.pattern.permute.xlu0 0
    %122 = vperm.xlu0 %121, %v52
    %v123 = vpop.permute.xlu0 %122
    %126 = vset.pattern.permute.xlu0 0
    %127 = vperm.xlu0 %126, %v53
    %v128 = vpop.permute.xlu0 %127
    %131 = vset.pattern.permute.xlu0 0
    %132 = vperm.xlu0 %131, %v54
    %v133 = vpop.permute.xlu0 %132
    %vm135 = vcmask 64512
    %v137 = vsel %vm135, %v22, 0
    %v140 = vsel %vm135, %v23, 0
    %v143 = vsel %vm135, %v24, 0
    %v146 = vsel %vm135, %v25, 0
    %v149 = vsel %vm135, %v26, 0
    %v152 = vsel %vm135, %v27, 0
    %v155 = vsel %vm135, %v28, 0
    %v158 = vsel %vm135, %v29, 0
    %v161 = vsel %vm135, %v30, 0
    %v164 = vsel %vm135, %v31, 0
    %v167 = vsel %vm135, %v32, 0
    %v170 = vsel %vm135, %v33, 0
    %v173 = vsel %vm135, %v34, 0
    %v176 = vsel %vm135, %v35, 0
    %v179 = vsel %vm135, %v36, 0
    %v182 = vsel %vm135, %v37, 0
    %184 = vmatprep.subr.mxu0 0.0
    %185 = vmatpush1.msra.mxu0 0.0
    %186 = vmatprep.subr.mxu0 0.0
    %187 = vmatpush1.msra.mxu0 0.0
    %188 = vmatprep.subr.mxu0 0.0
    %189 = vmatpush1.msra.mxu0 0.0
    %190 = vmatprep.subr.mxu0 0.0
    %191 = vmatpush1.msra.mxu0 0.0
    %192 = vmatprep.subr.mxu0 0.0
    %193 = vmatpush1.msra.mxu0 0.0
    %194 = vmatprep.subr.mxu0 0.0
    %195 = vmatpush1.msra.mxu0 0.0
    %196 = vmatprep.subr.mxu0 0.0
    %197 = vmatpush1.msra.mxu0 0.0
    %198 = vmatprep.subr.mxu0 0.0
    %199 = vmatpush1.msra.mxu0 0.0
    %200 = vmatprep.subr.mxu0 0.0
    %201 = vmatpush1.msra.mxu0 0.0
    %202 = vmatprep.subr.mxu0 0.0
    %203 = vmatpush1.msra.mxu0 0.0
    %204 = vmatprep.subr.mxu0 0.0
    %205 = vmatpush1.msra.mxu0 0.0
    %206 = vmatprep.subr.mxu0 0.0
    %207 = vmatpush1.msra.mxu0 0.0
    %208 = vmatprep.subr.mxu0 0.0
    %209 = vmatpush1.msra.mxu0 0.0
    %210 = vmatprep.subr.mxu0 0.0
    %211 = vmatpush1.msra.mxu0 0.0
    %212 = vmatprep.subr.mxu0 0.0
    %213 = vmatpush1.msra.mxu0 0.0
    %214 = vmatprep.subr.mxu0 0.0
    %215 = vmatpush1.msra.mxu0 %v38
    %216 = vmatprep.subr.mxu0 0.0
    %217 = vmatpush2.msra.mxu0 0.0
    %218 = vmatprep.subr.mxu0 0.0
    %219 = vmatpush2.msra.mxu0 0.0
    %220 = vmatprep.subr.mxu0 0.0
    %221 = vmatpush2.msra.mxu0 0.0
    %222 = vmatprep.subr.mxu0 0.0
    %223 = vmatpush2.msra.mxu0 0.0
    %224 = vmatprep.subr.mxu0 0.0
    %225 = vmatpush2.msra.mxu0 0.0
    %226 = vmatprep.subr.mxu0 0.0
    %227 = vmatpush2.msra.mxu0 0.0
    %228 = vmatprep.subr.mxu0 0.0
    %229 = vmatpush2.msra.mxu0 0.0
    %230 = vmatprep.subr.mxu0 0.0
    %231 = vmatpush2.msra.mxu0 0.0
    %232 = vmatprep.subr.mxu0 0.0
    %233 = vmatpush2.msra.mxu0 0.0
    %234 = vmatprep.subr.mxu0 0.0
    %235 = vmatpush2.msra.mxu0 0.0
    %236 = vmatprep.subr.mxu0 0.0
    %237 = vmatpush2.msra.mxu0 0.0
    %238 = vmatprep.subr.mxu0 0.0
    %239 = vmatpush2.msra.mxu0 0.0
    %240 = vmatprep.subr.mxu0 0.0
    %241 = vmatpush2.msra.mxu0 0.0
    %242 = vmatprep.subr.mxu0 0.0
    %243 = vmatpush2.msra.mxu0 0.0
    %244 = vmatprep.subr.mxu0 0.0
    %245 = vmatpush2.msra.mxu0 0.0
    %246 = vmatprep.subr.mxu0 0.0
    %247 = vmatpush2.msra.mxu0 0.0
    %248 = vmatprep.mubr.f32.mxu0 0.0
    %249 = vmatmul.mubr.f32.gmra.mxu0 %v137
    %v250 = vpop.f32.mrf.mxu0
    %v251 = vadd.f32 %v58, %v250
    %v252 = vpop.f32.mrf.mxu0
    %253 = vmatprep.mubr.f32.mxu0 0.0
    %254 = vmatmul.mubr.f32.gmra.mxu0 %v140
    %v255 = vpop.f32.mrf.mxu0
    %v256 = vadd.f32 %v63, %v255
    %v257 = vpop.f32.mrf.mxu0
    %258 = vmatprep.mubr.f32.mxu0 0.0
    %259 = vmatmul.mubr.f32.gmra.mxu0 %v143
    %v260 = vpop.f32.mrf.mxu0
    %v261 = vadd.f32 %v68, %v260
    %v262 = vpop.f32.mrf.mxu0
    %263 = vmatprep.mubr.f32.mxu0 0.0
    %264 = vmatmul.mubr.f32.gmra.mxu0 %v146
    %v265 = vpop.f32.mrf.mxu0
    %v266 = vadd.f32 %v73, %v265
    %v267 = vpop.f32.mrf.mxu0
    %268 = vmatprep.mubr.f32.mxu0 0.0
    %269 = vmatmul.mubr.f32.gmra.mxu0 %v149
    %v270 = vpop.f32.mrf.mxu0
    %v271 = vadd.f32 %v78, %v270
    %v272 = vpop.f32.mrf.mxu0
    %273 = vmatprep.mubr.f32.mxu0 0.0
    %274 = vmatmul.mubr.f32.gmra.mxu0 %v152
    %v275 = vpop.f32.mrf.mxu0
    %v276 = vadd.f32 %v83, %v275
    %v277 = vpop.f32.mrf.mxu0
    %278 = vmatprep.mubr.f32.mxu0 0.0
    %279 = vmatmul.mubr.f32.gmra.mxu0 %v155
    %v280 = vpop.f32.mrf.mxu0
    %v281 = vadd.f32 %v88, %v280
    %v282 = vpop.f32.mrf.mxu0
    %283 = vmatprep.mubr.f32.mxu0 0.0
    %284 = vmatmul.mubr.f32.gmra.mxu0 %v158
    %v285 = vpop.f32.mrf.mxu0
    %v286 = vadd.f32 %v93, %v285
    %v287 = vpop.f32.mrf.mxu0
    %288 = vmatprep.mubr.f32.mxu0 0.0
    %289 = vmatmul.mubr.f32.gmra.mxu0 %v161
    %v290 = vpop.f32.mrf.mxu0
    %v291 = vadd.f32 %v98, %v290
    %v292 = vpop.f32.mrf.mxu0
    %293 = vmatprep.mubr.f32.mxu0 0.0
    %294 = vmatmul.mubr.f32.gmra.mxu0 %v164
    %v295 = vpop.f32.mrf.mxu0
    %v296 = vadd.f32 %v103, %v295
    %v297 = vpop.f32.mrf.mxu0
    %298 = vmatprep.mubr.f32.mxu0 0.0
    %299 = vmatmul.mubr.f32.gmra.mxu0 %v167
    %v300 = vpop.f32.mrf.mxu0
    %v301 = vadd.f32 %v108, %v300
    %v302 = vpop.f32.mrf.mxu0
    %303 = vmatprep.mubr.f32.mxu0 0.0
    %304 = vmatmul.mubr.f32.gmra.mxu0 %v170
    %v305 = vpop.f32.mrf.mxu0
    %v306 = vadd.f32 %v113, %v305
    %v307 = vpop.f32.mrf.mxu0
    %308 = vmatprep.mubr.f32.mxu0 0.0
    %309 = vmatmul.mubr.f32.gmra.mxu0 %v173
    %v310 = vpop.f32.mrf.mxu0
    %v311 = vadd.f32 %v118, %v310
    %v312 = vpop.f32.mrf.mxu0
    %313 = vmatprep.mubr.f32.mxu0 0.0
    %314 = vmatmul.mubr.f32.gmra.mxu0 %v176
    %v315 = vpop.f32.mrf.mxu0
    %v316 = vadd.f32 %v123, %v315
    %v317 = vpop.f32.mrf.mxu0
    %318 = vmatprep.mubr.f32.mxu0 0.0
    %319 = vmatmul.mubr.f32.gmra.mxu0 %v179
    %v320 = vpop.f32.mrf.mxu0
    %v321 = vadd.f32 %v128, %v320
    %v322 = vpop.f32.mrf.mxu0
    %323 = vmatprep.mubr.f32.mxu0 0.0
    %324 = vmatmul.mubr.f32.gmra.mxu0 %v182
    %v325 = vpop.f32.mrf.mxu0
    %v326 = vadd.f32 %v133, %v325
    %v327 = vpop.f32.mrf.mxu0
    %328 = vdwg.mxu0
    %v329 = vmax.f32 %v251, 0.0
    %v330 = vmax.f32 %v256, 0.0
    %v331 = vmax.f32 %v261, 0.0
    %v332 = vmax.f32 %v266, 0.0
    %v333 = vmax.f32 %v271, 0.0
    %v334 = vmax.f32 %v276, 0.0
    %v335 = vmax.f32 %v281, 0.0
    %v336 = vmax.f32 %v286, 0.0
    %v337 = vmax.f32 %v291, 0.0
    %v338 = vmax.f32 %v296, 0.0
    %v339 = vmax.f32 %v301, 0.0
    %v340 = vmax.f32 %v306, 0.0
    %v341 = vmax.f32 %v311, 0.0
    %v342 = vmax.f32 %v316, 0.0
    %v343 = vmax.f32 %v321, 0.0
    %v344 = vmax.f32 %v326, 0.0
    %v345 = vld [vmem:[%s3] sm:$0xff]
    %v346 = vld [vmem:[%s3 + $0x8] sm:$0xff]
    %v347 = vld [vmem:[%s3 + $0x10] sm:$0xff]
    %v348 = vld [vmem:[%s3 + $0x18] sm:$0xff]
    %v349 = vld [vmem:[%s3 + $0x20] sm:$0xff]
    %v350 = vld [vmem:[%s3 + $0x28] sm:$0xff]
    %v351 = vld [vmem:[%s3 + $0x30] sm:$0xff]
    %v352 = vld [vmem:[%s3 + $0x38] sm:$0xff]
    %v353 = vld [vmem:[%s3 + $0x40] sm:$0xff]
    %v354 = vld [vmem:[%s3 + $0x48] sm:$0xff]
    %v355 = vld [vmem:[%s3 + $0x50] sm:$0xff]
    %v356 = vld [vmem:[%s3 + $0x58] sm:$0xff]
    %v357 = vld [vmem:[%s3 + $0x60] sm:$0xff]
    %v358 = vld [vmem:[%s3 + $0x68] sm:$0xff]
    %v359 = vld [vmem:[%s3 + $0x70] sm:$0xff]
    %v360 = vld [vmem:[%s3 + $0x78] sm:$0xff]
    %362 = vset.pattern.permute.xlu0 0
    %363 = vperm.xlu0 %362, %v345
    %v364 = vpop.permute.xlu0 %363
    %367 = vset.pattern.permute.xlu0 0
    %368 = vperm.xlu0 %367, %v346
    %v369 = vpop.permute.xlu0 %368
    %372 = vset.pattern.permute.xlu0 0
    %373 = vperm.xlu0 %372, %v347
    %v374 = vpop.permute.xlu0 %373
    %377 = vset.pattern.permute.xlu0 0
    %378 = vperm.xlu0 %377, %v348
    %v379 = vpop.permute.xlu0 %378
    %382 = vset.pattern.permute.xlu0 0
    %383 = vperm.xlu0 %382, %v349
    %v384 = vpop.permute.xlu0 %383
    %387 = vset.pattern.permute.xlu0 0
    %388 = vperm.xlu0 %387, %v350
    %v389 = vpop.permute.xlu0 %388
    %392 = vset.pattern.permute.xlu0 0
    %393 = vperm.xlu0 %392, %v351
    %v394 = vpop.permute.xlu0 %393
    %397 = vset.pattern.permute.xlu0 0
    %398 = vperm.xlu0 %397, %v352
    %v399 = vpop.permute.xlu0 %398
    %402 = vset.pattern.permute.xlu0 0
    %403 = vperm.xlu0 %402, %v353
    %v404 = vpop.permute.xlu0 %403
    %407 = vset.pattern.permute.xlu0 0
    %408 = vperm.xlu0 %407, %v354
    %v409 = vpop.permute.xlu0 %408
    %412 = vset.pattern.permute.xlu0 0
    %413 = vperm.xlu0 %412, %v355
    %v414 = vpop.permute.xlu0 %413
    %417 = vset.pattern.permute.xlu0 0
    %418 = vperm.xlu0 %417, %v356
    %v419 = vpop.permute.xlu0 %418
    %422 = vset.pattern.permute.xlu0 0
    %423 = vperm.xlu0 %422, %v357
    %v424 = vpop.permute.xlu0 %423
    %427 = vset.pattern.permute.xlu0 0
    %428 = vperm.xlu0 %427, %v358
    %v429 = vpop.permute.xlu0 %428
    %432 = vset.pattern.permute.xlu0 0
    %433 = vperm.xlu0 %432, %v359
    %v434 = vpop.permute.xlu0 %433
    %437 = vset.pattern.permute.xlu0 0
    %438 = vperm.xlu0 %437, %v360
    %v439 = vpop.permute.xlu0 %438
    %v441 = vmul.f32 %v329, %v364
    %v442 = vmul.f32 %v330, %v369
    %v443 = vmul.f32 %v331, %v374
    %v444 = vmul.f32 %v332, %v379
    %v445 = vmul.f32 %v333, %v384
    %v446 = vmul.f32 %v334, %v389
    %v447 = vmul.f32 %v335, %v394
    %v448 = vmul.f32 %v336, %v399
    %v449 = vmul.f32 %v337, %v404
    %v450 = vmul.f32 %v338, %v409
    %v451 = vmul.f32 %v339, %v414
    %v452 = vmul.f32 %v340, %v419
    %v453 = vmul.f32 %v341, %v424
    %v454 = vmul.f32 %v342, %v429
    %v455 = vmul.f32 %v343, %v434
    %v456 = vmul.f32 %v344, %v439
    %v457 = vsel %vm135, %v441, 0.0
    %v458 = vsel %vm135, %v442, 0.0
    %v459 = vadd.f32 %v457, %v458
    %v460 = vsel %vm135, %v443, 0.0
    %v461 = vadd.f32 %v459, %v460
    %v462 = vsel %vm135, %v444, 0.0
    %v463 = vadd.f32 %v461, %v462
    %v464 = vsel %vm135, %v445, 0.0
    %v465 = vadd.f32 %v463, %v464
    %v466 = vsel %vm135, %v446, 0.0
    %v467 = vadd.f32 %v465, %v466
    %v468 = vsel %vm135, %v447, 0.0
    %v469 = vadd.f32 %v467, %v468
    %v470 = vsel %vm135, %v448, 0.0
    %v471 = vadd.f32 %v469, %v470
    %v472 = vsel %vm135, %v449, 0.0
    %v473 = vadd.f32 %v471, %v472
    %v474 = vsel %vm135, %v450, 0.0
    %v475 = vadd.f32 %v473, %v474
    %v476 = vsel %vm135, %v451, 0.0
    %v477 = vadd.f32 %v475, %v476
    %v478 = vsel %vm135, %v452, 0.0
    %v479 = vadd.f32 %v477, %v478
    %v480 = vsel %vm135, %v453, 0.0
    %v481 = vadd.f32 %v479, %v480
    %v482 = vsel %vm135, %v454, 0.0
    %v483 = vadd.f32 %v481, %v482
    %v484 = vsel %vm135, %v455, 0.0
    %v485 = vadd.f32 %v483, %v484
    %v486 = vsel %vm135, %v456, 0.0
    %v487 = vadd.f32 %v485, %v486
    %v488 = vrot.slane %v487, 4
    %v489 = vadd.f32 %v487, %v488
    %v490 = vrot.slane %v489, 2
    %v491 = vadd.f32 %v489, %v490
    %v492 = vrot.slane %v491, 1
    %v493 = vadd.f32 %v491, %v492
    %s494 = sld [smem:[#allocation2]]
    %v495 = vstv %s494
    %v496 = vadd.f32 %v493, %v495
    %vm497 = vcmask 57344
    %498 = vst.msk [vmem:[#allocation3] sm:$0x1] %vm497, %v496
    // Predicated region
    $region22: #{tpu_custom_call.1} parent=1 // pred_check
      _
    $region23: #{tpu_custom_call.1} parent=1 // pred_check_branch
      %500 = sbr.rel (0) target = $region25
    $region24: #{tpu_custom_call.1} parent=1 // pred_region
      %s502 = ssub.s32 16, 16
      %503 = vsyncadd [#allocation4], %s502
      %s505 = sshll.u32 [#allocation3], 4
      %s506 = int_to_ptr.vmem [resolvable:$true] %s505
      %508 = dma.vmem_to_hbm [thread:$0]  %s506, 16, %s5, [#allocation4]
    $region25: #{tpu_custom_call.1} parent=1 // pred_fallthru
      _
    // Predicated region
    $region26: #{tpu_custom_call.1} parent=1 // pred_check
      _
    $region27: #{tpu_custom_call.1} parent=1 // pred_check_branch
      %510 = sbr.rel (0) target = $region29
    $region28: #{tpu_custom_call.1} parent=1 // pred_region
      %511 = dma.done [#allocation4], 16
    $region29: #{tpu_custom_call.1} parent=1 // pred_fallthru
      _
    %512 = vsyncpa [#allocation4], 1

</llo_original>
